<compile_context>
chip_gen: v6e
topology: v6e:2x2x1
jax: 0.10.0
libtpu: 0.0.40
codegen_flags: <defaults>
</compile_context>

<pallas_src>
import functools

import jax
import jax.numpy as jnp
from jax.experimental import pallas as pl
from jax.experimental.pallas import tpu as pltpu

_LANE = 128
_SUB = 8
_TARGET_TILE_ROWS = 8192          # (8192, 128) f32 block = 4 MiB per buffer
_VMEM_LIMIT_BYTES = 40 * 1024 * 1024


def _ceil_div(a, b):
    return -(-a // b)


def _round_up(a, b):
    return _ceil_div(a, b) * b


def _num_core_splits():
    """2 only on chips with two TensorCores sharing the grid (v4 megacore, v7x)."""
    try:
        dev = jax.devices()[0]
        if dev.platform != "tpu":
            return 1
        kind = dev.device_kind.lower()
    except Exception:
        return 1
    return 2 if any(tag in kind for tag in ("v4", "v7", "7x")) else 1


def _vae_loss_kernel(x_ref, t_ref, mu_ref, lv_ref, out_ref, acc_ref, *,
                     inv_n, nc, tile_rows, full_rows, lane_rem, need_mask):
    # Grid queries only at the top level of the kernel (never inside pl.when).
    c = pl.program_id(0)
    i = pl.program_id(1)
    k_steps = pl.num_programs(1)
    is_first = i == 0
    is_last = i == k_steps - 1

    @pl.when(is_first)
    def _init():
        acc_ref[...] = jnp.zeros_like(acc_ref)

    # Stream native dtype from HBM, upcast per-tile in VMEM.
    x = x_ref[...].astype(jnp.float32)
    t = t_ref[...].astype(jnp.float32)
    # Numerically stable BCE-with-logits (matches torch.nn.BCEWithLogitsLoss):
    #   max(x, 0) - x * t + log(1 + exp(-|x|))
    bce = jnp.maximum(x, 0.0) - x * t + jnp.log1p(jnp.exp(-jnp.abs(x)))

    if need_mask:
        # Mask by intended global element index; covers row raggedness, lane
        # raggedness and any fully out-of-range block on the 'parallel' split.
        row = jax.lax.broadcasted_iota(jnp.int32, bce.shape, 0)
        lane = jax.lax.broadcasted_iota(jnp.int32, bce.shape, 1)
        grow = (c * k_steps + i) * tile_rows + row
        valid = (grow < full_rows) | ((grow == full_rows) & (lane < lane_rem))
        bce = jnp.where(valid, bce, 0.0)

    # Keep the hot loop as vld + VPU adds into one vreg-shaped accumulator;
    # defer the cross-lane reduction to the final step.
    if tile_rows % _SUB == 0:
        acc_ref[...] += jnp.sum(bce.reshape(-1, _SUB, _LANE), axis=0)
    else:  # tiny full-array block whose row count is not a multiple of 8
        acc_ref[...] += jnp.sum(bce, axis=0, keepdims=True)

    @pl.when(is_last)
    def _finalize():
        part = jnp.sum(acc_ref[...]) * inv_n
        mu = mu_ref[...].astype(jnp.float32)
        lv = lv_ref[...].astype(jnp.float32)
        # KLD = -0.5 * sum(1 + logvar - mu^2 - exp(logvar)); (0,0)-pad -> 0.
        kld = -0.5 * jnp.sum(1.0 + lv - mu * mu - jnp.exp(lv))
        if nc == 1:
            value = part + kld
        else:
            # KLD added exactly once, by the last 'parallel' block (c is a
            # value computed at top level, safe to use inside this branch).
            value = part + jnp.where(c == nc - 1, kld, 0.0)
        r = jax.lax.broadcasted_iota(jnp.int32, (_SUB, _LANE), 0)
        l = jax.lax.broadcasted_iota(jnp.int32, (_SUB, _LANE), 1)
        out_ref[...] = jnp.where((r == 0) & (l == 0), value, 0.0)


def vae_loss(x, target, mu, logvar):
    n = x.size
    nc = _num_core_splits()

    lane_rem = n % _LANE
    lane_pad = (_LANE - lane_rem) % _LANE
    rows = (n + lane_pad) // _LANE

    xf = x.reshape(-1)
    tf = target.reshape(-1)
    if lane_pad:
        # Only non-128-multiple inputs pay this copy; values are masked
        # in-kernel so the pad content is irrelevant.
        xf = jnp.pad(xf, (0, lane_pad))
        tf = jnp.pad(tf, (0, lane_pad))
    xf = xf.reshape(rows, _LANE)     # free reshape when lane_pad == 0
    tf = tf.reshape(rows, _LANE)

    tile_rows = min(_TARGET_TILE_ROWS, _round_up(_ceil_div(rows, nc), _SUB))
    if tile_rows > rows:
        tile_rows = rows             # full-dim block (legal even if % 8 != 0)
    k_steps = _ceil_div(_ceil_div(rows, tile_rows), nc)
    covered = nc * k_steps * tile_rows * _LANE
    need_mask = covered != n

    # Latent statistics: tiny, kept resident; zero-pad -> KLD term is 0.
    m = mu.reshape(-1)
    lv = logvar.reshape(-1)
    lat_pad = (-m.size) % _LANE
    if lat_pad:
        m = jnp.pad(m, (0, lat_pad))
        lv = jnp.pad(lv, (0, lat_pad))
    m = m.reshape(-1, _LANE)
    lv = lv.reshape(-1, _LANE)
    lat_rows = m.shape[0]

    acc_rows = _SUB if tile_rows % _SUB == 0 else 1

    kern = functools.partial(
        _vae_loss_kernel, inv_n=1.0 / float(n), nc=nc, tile_rows=tile_rows,
        full_rows=n // _LANE, lane_rem=lane_rem, need_mask=need_mask)

    xt_spec = pl.BlockSpec((tile_rows, _LANE),
                           lambda c, i: (c * k_steps + i, 0))
    lat_spec = pl.BlockSpec((lat_rows, _LANE), lambda c, i: (0, 0))

    partials = pl.pallas_call(
        kern,
        out_shape=jax.ShapeDtypeStruct((nc * _SUB, _LANE), jnp.float32),
        grid_spec=pltpu.PrefetchScalarGridSpec(
            num_scalar_prefetch=0,
            grid=(nc, k_steps),
            in_specs=[xt_spec, xt_spec, lat_spec, lat_spec],
            out_specs=pl.BlockSpec((_SUB, _LANE), lambda c, i: (c, 0)),
            scratch_shapes=[pltpu.VMEM((acc_rows, _LANE), jnp.float32)],
        ),
        compiler_params=pltpu.CompilerParams(
            dimension_semantics=("parallel", "arbitrary"),
            vmem_limit_bytes=_VMEM_LIMIT_BYTES),
    )(xf, tf, m, lv)
    # Each core's tile holds its partial at [0, 0] and zeros elsewhere.
    return jnp.sum(partials)


def _vae_loss_ref(x, target, mu, logvar):
    # Pure-JAX reference for verification.
    x = x.astype(jnp.float32)
    t = target.astype(jnp.float32)
    bce = jnp.maximum(x, 0.0) - x * t + jnp.log1p(jnp.exp(-jnp.abs(x)))
    bce_mean = jnp.mean(bce)
    kld = -0.5 * jnp.sum(1.0 + logvar - mu * mu - jnp.exp(logvar))
    return bce_mean + kld


if __name__ == "__main__":
    key = jax.random.PRNGKey(0)
    k1, k2, k3, k4 = jax.random.split(key, 4)

    # Shapes implied by a small VAE: reconstruction logits over images,
    # latent statistics per-sample.
    B, C, H, W = 2, 4, 16, 16
    LATENT = 32

    x = jax.random.normal(k1, (B, C, H, W), dtype=jnp.float32)          # logits
    target = jax.random.uniform(k2, (B, C, H, W), dtype=jnp.float32)    # targets in [0, 1]
    mu = 0.1 * jax.random.normal(k3, (B, LATENT), dtype=jnp.float32)
    logvar = 0.1 * jax.random.normal(k4, (B, LATENT), dtype=jnp.float32)

    loss = jax.block_until_ready(vae_loss(x, target, mu, logvar))
    ref = jax.block_until_ready(_vae_loss_ref(x, target, mu, logvar))
    assert jnp.allclose(loss, ref, rtol=1e-4, atol=1e-4), (loss, ref)

    # Ragged (non-multiple-of-128) shape exercises the in-kernel mask path.
    xr = jax.random.normal(k1, (3, 5, 7, 11), dtype=jnp.float32)
    tr = jax.random.uniform(k2, (3, 5, 7, 11), dtype=jnp.float32)
    mur = 0.1 * jax.random.normal(k3, (3, 16), dtype=jnp.float32)
    lvr = 0.1 * jax.random.normal(k4, (3, 16), dtype=jnp.float32)
    loss_r = jax.block_until_ready(vae_loss(xr, tr, mur, lvr))
    ref_r = jax.block_until_ready(_vae_loss_ref(xr, tr, mur, lvr))
    assert jnp.allclose(loss_r, ref_r, rtol=1e-4, atol=1e-4), (loss_r, ref_r)

    print("KERNEL_OK")
</pallas_src>

<mosaic_0001>
module attributes {stable_mosaic.version = 11 : i64} {
  func.func @_vae_loss_kernel(%arg0: i32, %arg1: i32, %arg2: memref<16x128xf32, #tpu.memory_space<vmem>>, %arg3: memref<16x128xf32, #tpu.memory_space<vmem>>, %arg4: memref<1x128xf32, #tpu.memory_space<vmem>>, %arg5: memref<1x128xf32, #tpu.memory_space<vmem>>, %arg6: memref<8x128xf32, #tpu.memory_space<vmem>>, %arg7: memref<8x128xf32, #tpu.memory_space<vmem>>) attributes {dimension_semantics = [#tpu.dimension_semantics<parallel>, #tpu.dimension_semantics<arbitrary>], iteration_bounds = array<i64: 1, 1>, scalar_prefetch = 0 : i64, scratch_operands = 1 : i64, tpu.core_type = #tpu.core_type<tc>, window_params = [{transform_indices = @transform_0, window_bounds = array<i64: 16, 128>}, {transform_indices = @transform_1, window_bounds = array<i64: 16, 128>}, {pipeline_mode = #tpu.pipeline_mode<synchronous>, transform_indices = @transform_2, window_bounds = array<i64: 1, 128>}, {pipeline_mode = #tpu.pipeline_mode<synchronous>, transform_indices = @transform_3, window_bounds = array<i64: 1, 128>}, {transform_indices = @transform_4, window_bounds = array<i64: 8, 128>}]} {
    %c0_i32 = arith.constant 0 : i32
    %0 = arith.cmpi eq, %arg1, %c0_i32 : i32
    %c0_i32_0 = arith.constant 0 : i32
    %1 = arith.cmpi eq, %arg1, %c0_i32_0 : i32
    %2 = arith.extui %0 : i1 to i32
    %c0_i32_1 = arith.constant 0 : i32
    %3 = arith.cmpi ne, %2, %c0_i32_1 : i32
    scf.if %3 {
      %cst_12 = arith.constant 0.000000e+00 : f32
      %23 = vector.broadcast %cst_12 : f32 to vector<8x128xf32>
      %c0_13 = arith.constant 0 : index
      %c0_14 = arith.constant 0 : index
      %24 = vector.load %arg7[%c0_13, %c0_14] : memref<8x128xf32, #tpu.memory_space<vmem>>, vector<8x128xf32>
      tpu.vector_store %arg7[%c0_13, %c0_14], %23 {strides = array<i32>} : memref<8x128xf32, #tpu.memory_space<vmem>>, vector<8x128xf32>,
    } else {
    }
    %c0 = arith.constant 0 : index
    %c0_2 = arith.constant 0 : index
    %4 = vector.load %arg2[%c0, %c0_2] : memref<16x128xf32, #tpu.memory_space<vmem>>, vector<16x128xf32>
    %c0_3 = arith.constant 0 : index
    %c0_4 = arith.constant 0 : index
    %5 = vector.load %arg3[%c0_3, %c0_4] : memref<16x128xf32, #tpu.memory_space<vmem>>, vector<16x128xf32>
    %cst = arith.constant 0.000000e+00 : f32
    %6 = vector.broadcast %cst : f32 to vector<16x128xf32>
    %7 = arith.maximumf %4, %6 : vector<16x128xf32>
    %8 = arith.mulf %4, %5 : vector<16x128xf32>
    %9 = arith.subf %7, %8 : vector<16x128xf32>
    %10 = math.absf %4 : vector<16x128xf32>
    %cst_5 = arith.constant 0.000000e+00 : f32
    %11 = vector.broadcast %cst_5 : f32 to vector<16x128xf32>
    %12 = arith.subf %11, %10 : vector<16x128xf32>
    %13 = math.exp %12 : vector<16x128xf32>
    %14 = math.log1p %13 : vector<16x128xf32>
    %15 = arith.addf %9, %14 : vector<16x128xf32>
    %c0_6 = arith.constant 0 : index
    %c0_7 = arith.constant 0 : index
    %16 = vector.load %arg7[%c0_6, %c0_7] : memref<8x128xf32, #tpu.memory_space<vmem>>, vector<8x128xf32>
    %17 = vector.shape_cast %15 : vector<16x128xf32> to vector<2x8x128xf32>
    %cst_8 = arith.constant dense<0.000000e+00> : vector<8x128xf32>
    %18 = vector.multi_reduction <add>, %17, %cst_8 [0] : vector<2x8x128xf32> to vector<8x128xf32>
    %19 = arith.addf %16, %18 : vector<8x128xf32>
    %c0_9 = arith.constant 0 : index
    %c0_10 = arith.constant 0 : index
    %20 = vector.load %arg7[%c0_9, %c0_10] : memref<8x128xf32, #tpu.memory_space<vmem>>, vector<8x128xf32>
    tpu.vector_store %arg7[%c0_9, %c0_10], %19 {strides = array<i32>} : memref<8x128xf32, #tpu.memory_space<vmem>>, vector<8x128xf32>,
    %21 = arith.extui %1 : i1 to i32
    %c0_i32_11 = arith.constant 0 : i32
    %22 = arith.cmpi ne, %21, %c0_i32_11 : i32
    scf.if %22 {
      %c0_12 = arith.constant 0 : index
      %c0_13 = arith.constant 0 : index
      %23 = vector.load %arg7[%c0_12, %c0_13] : memref<8x128xf32, #tpu.memory_space<vmem>>, vector<8x128xf32>
      %24 = vector.shape_cast %23 : vector<8x128xf32> to vector<1x8x128xf32>
      %cst_14 = arith.constant dense<0.000000e+00> : vector<1xf32>
      %25 = vector.multi_reduction <add>, %24, %cst_14 [1, 2] : vector<1x8x128xf32> to vector<1xf32>
      %26 = vector.shape_cast %25 : vector<1xf32> to vector<1x1x1xf32>
      %27 = vector.extract %26[0, 0, 0] : f32 from vector<1x1x1xf32>
      %cst_15 = arith.constant 4.8828125E-4 : f32
      %28 = arith.mulf %27, %cst_15 : f32
      %c0_16 = arith.constant 0 : index
      %c0_17 = arith.constant 0 : index
      %29 = vector.load %arg4[%c0_16, %c0_17] : memref<1x128xf32, #tpu.memory_space<vmem>>, vector<1x128xf32>
      %c0_18 = arith.constant 0 : index
      %c0_19 = arith.constant 0 : index
      %30 = vector.load %arg5[%c0_18, %c0_19] : memref<1x128xf32, #tpu.memory_space<vmem>>, vector<1x128xf32>
      %cst_20 = arith.constant 1.000000e+00 : f32
      %31 = vector.broadcast %cst_20 : f32 to vector<1x128xf32>
      %32 = arith.addf %31, %30 : vector<1x128xf32>
      %33 = arith.mulf %29, %29 : vector<1x128xf32>
      %34 = arith.subf %32, %33 : vector<1x128xf32>
      %35 = math.exp %30 : vector<1x128xf32>
      %36 = arith.subf %34, %35 : vector<1x128xf32>
      %37 = vector.shape_cast %36 : vector<1x128xf32> to vector<1x1x128xf32>
      %cst_21 = arith.constant dense<0.000000e+00> : vector<1xf32>
      %38 = vector.multi_reduction <add>, %37, %cst_21 [1, 2] : vector<1x1x128xf32> to vector<1xf32>
      %39 = vector.shape_cast %38 : vector<1xf32> to vector<1x1x1xf32>
      %40 = vector.extract %39[0, 0, 0] : f32 from vector<1x1x1xf32>
      %cst_22 = arith.constant -5.000000e-01 : f32
      %41 = arith.mulf %cst_22, %40 : f32
      %42 = arith.addf %28, %41 : f32
      %43 = tpu.iota {dimensions = array<i32: 0>} : vector<8x128xi32>
      %44 = tpu.iota {dimensions = array<i32: 1>} : vector<8x128xi32>
      %c0_i32_23 = arith.constant 0 : i32
      %45 = vector.broadcast %c0_i32_23 : i32 to vector<8x128xi32>
      %46 = arith.cmpi eq, %43, %45 : vector<8x128xi32>
      %c0_i32_24 = arith.constant 0 : i32
      %47 = vector.broadcast %c0_i32_24 : i32 to vector<8x128xi32>
      %48 = arith.cmpi eq, %44, %47 : vector<8x128xi32>
      %49 = arith.andi %46, %48 : vector<8x128xi1>
      %cst_25 = arith.constant 0.000000e+00 : f32
      %50 = vector.broadcast %42 : f32 to vector<8x128xf32>
      %51 = vector.broadcast %cst_25 : f32 to vector<8x128xf32>
      %52 = arith.select %49, %50, %51 : vector<8x128xi1>, vector<8x128xf32>
      %c0_26 = arith.constant 0 : index
      %c0_27 = arith.constant 0 : index
      %53 = vector.load %arg6[%c0_26, %c0_27] : memref<8x128xf32, #tpu.memory_space<vmem>>, vector<8x128xf32>
      tpu.vector_store %arg6[%c0_26, %c0_27], %52 {strides = array<i32>} : memref<8x128xf32, #tpu.memory_space<vmem>>, vector<8x128xf32>,
    } else {
    }
    return
  }
  func.func @transform_0(%arg0: i32, %arg1: i32) -> (i32, i32) {
    %c1_i32 = arith.constant 1 : i32
    %0 = arith.muli %arg0, %c1_i32 : i32
    %1 = arith.addi %0, %arg1 : i32
    %c0_i32 = arith.constant 0 : i32
    %c0_i32_0 = arith.constant 0 : i32
    return %1, %c0_i32 : i32, i32
  }
  func.func @transform_1(%arg0: i32, %arg1: i32) -> (i32, i32) {
    %c1_i32 = arith.constant 1 : i32
    %0 = arith.muli %arg0, %c1_i32 : i32
    %1 = arith.addi %0, %arg1 : i32
    %c0_i32 = arith.constant 0 : i32
    %c0_i32_0 = arith.constant 0 : i32
    return %1, %c0_i32 : i32, i32
  }
  func.func @transform_2(%arg0: i32, %arg1: i32) -> (i32, i32) {
    %c0_i32 = arith.constant 0 : i32
    %c0_i32_0 = arith.constant 0 : i32
    %c0_i32_1 = arith.constant 0 : i32
    return %c0_i32, %c0_i32_0 : i32, i32
  }
  func.func @transform_3(%arg0: i32, %arg1: i32) -> (i32, i32) {
    %c0_i32 = arith.constant 0 : i32
    %c0_i32_0 = arith.constant 0 : i32
    %c0_i32_1 = arith.constant 0 : i32
    return %c0_i32, %c0_i32_0 : i32, i32
  }
  func.func @transform_4(%arg0: i32, %arg1: i32) -> (i32, i32) {
    %c0_i32 = arith.constant 0 : i32
    %c0_i32_0 = arith.constant 0 : i32
    return %arg0, %c0_i32 : i32, i32
  }
}

</mosaic_0001>

<llo_original>
// kernel: tpu_custom_call.1
$region0: #{tpu_custom_call.1}
  #allocation0 [shape = 'u32[]', space=smem, size = 0x4, offset = 0x4, fixed_abs, tag = 'smem constant byte address 0x4 - core index']
  #allocation1 [shape = 'u32[144,128]{1,0:T(1,128)}', space=vmem, size = 0x12000, scoped, tag = 'internal scratch']
  #allocation2 [shape = 'f32[8,128]{1,0:T(8,128)}', space=vmem, size = 0x1000, scoped, tag = 'scratch operand']
  %s0 = inlined_call_operand.hbm [shape: f32[16,128], index: 0, kind: input, shape index: {}]
  %s1 = inlined_call_operand.hbm [shape: f32[16,128], index: 1, kind: input, shape index: {}]
  %s2 = inlined_call_operand.vmem [shape: f32[1,128], index: 2, kind: input, shape index: {}]
  %s3 = inlined_call_operand.vmem [shape: f32[1,128], index: 3, kind: input, shape index: {}]
  %s4 = inlined_call_operand.hbm [shape: f32[8,128], index: 4, kind: output, shape index: {}]
  %s5 = sld [smem:[#allocation0]]
  $region42: #{tpu_custom_call.1} parent=0
    _
  %s7 = ssub.s32 1, %s5
  %s8 = scalar_select 0, %s7, %s5
  $region1: #{tpu_custom_call.1} parent=0
    #allocation3 [shape = 'u8[8192]{0}', space=vmem, size = 0x2000, scoped, tag = 'input window, operand 0, single buffered']
    #allocation4 [shape = 's32[1]{0}', space=sflag, size = 0x4, scoped, tag = 'scoped memory for tpu_custom_call.1']
    #allocation5 [shape = 's32[1]{0}', space=sflag, size = 0x4, scoped, tag = 'scoped memory for tpu_custom_call.1']
    #allocation6 [shape = 'u8[8192]{0}', space=vmem, size = 0x2000, scoped, tag = 'input window, operand 1, single buffered']
    #allocation7 [shape = 's32[1]{0}', space=sflag, size = 0x4, scoped, tag = 'scoped memory for tpu_custom_call.1']
    #allocation8 [shape = 'u8[4096]{0}', space=vmem, size = 0x1000, scoped, tag = 'output window, operand 0, single buffered']
    %9 = vsyncpa [#allocation4], 0
    %10 = vsyncpa [#allocation7], 0
    %11 = vsyncpa [#allocation5], 0
    // Predicated region
    $region2: #{tpu_custom_call.1} parent=1 // pred_check
      _
    $region3: #{tpu_custom_call.1} parent=1 // pred_check_branch
      %13 = sbr.rel (0) target = $region5
    $region4: #{tpu_custom_call.1} parent=1 // pred_region
      %s14 = sadd.s32 0, 0
      %s15 = smul.u32 2, %s14
      %s17 = ssub.s32 256, 256
      %18 = vsyncadd [#allocation4], %s17
      %s19 = smul.addr %s15, 128
      %s20 = scalar_lea.hbm %s0, %s19
      %s21 = sshll.u32 [#allocation3], 4
      %s22 = int_to_ptr.vmem [resolvable:$true] %s21
      %27 = dma.hbm_to_vmem [thread:$0]  %s20, 256, %s22, [#allocation4], 128, 128, 8
    $region5: #{tpu_custom_call.1} parent=1 // pred_fallthru
      _
    // Predicated region
    $region6: #{tpu_custom_call.1} parent=1 // pred_check
      _
    $region7: #{tpu_custom_call.1} parent=1 // pred_check_branch
      %29 = sbr.rel (0) target = $region9
    $region8: #{tpu_custom_call.1} parent=1 // pred_region
      %s30 = sadd.s32 0, 0
      %s31 = smul.u32 2, %s30
      %s33 = ssub.s32 256, 256
      %34 = vsyncadd [#allocation7], %s33
      %s35 = smul.addr %s31, 128
      %s36 = scalar_lea.hbm %s1, %s35
      %s37 = sshll.u32 [#allocation6], 4
      %s38 = int_to_ptr.vmem [resolvable:$true] %s37
      %43 = dma.hbm_to_vmem [thread:$0]  %s36, 256, %s38, [#allocation7], 128, 128, 8
    $region9: #{tpu_custom_call.1} parent=1 // pred_fallthru
      _
    // Predicated region
    $region10: #{tpu_custom_call.1} parent=1 // pred_check
      _
    $region11: #{tpu_custom_call.1} parent=1 // pred_check_branch
      %45 = sbr.rel (0) target = $region13
    $region12: #{tpu_custom_call.1} parent=1 // pred_region
      _
    $region13: #{tpu_custom_call.1} parent=1 // pred_fallthru
      _
    // Predicated region
    $region14: #{tpu_custom_call.1} parent=1 // pred_check
      _
    $region15: #{tpu_custom_call.1} parent=1 // pred_check_branch
      %47 = sbr.rel (0) target = $region17
    $region16: #{tpu_custom_call.1} parent=1 // pred_region
      _
    $region17: #{tpu_custom_call.1} parent=1 // pred_fallthru
      _
    // Predicated region
    $region18: #{tpu_custom_call.1} parent=1 // pred_check
      _
    $region19: #{tpu_custom_call.1} parent=1 // pred_check_branch
      %49 = sbr.rel (0) target = $region21
    $region20: #{tpu_custom_call.1} parent=1 // pred_region
      %50 = dma.done [#allocation4], 256
    $region21: #{tpu_custom_call.1} parent=1 // pred_fallthru
      _
    // Predicated region
    $region22: #{tpu_custom_call.1} parent=1 // pred_check
      _
    $region23: #{tpu_custom_call.1} parent=1 // pred_check_branch
      %52 = sbr.rel (0) target = $region25
    $region24: #{tpu_custom_call.1} parent=1 // pred_region
      %53 = dma.done [#allocation7], 256
    $region25: #{tpu_custom_call.1} parent=1 // pred_fallthru
      _
    %s54 = sadd.s32 0, 0
    %s55 = smul.u32 2, %s54
    %s56 = sadd.s32 0, 0
    %s57 = smul.u32 2, %s56
    %p58 = scmp.eq.s32.totalorder 0, 0
    // Predicated region
    $region26: #{tpu_custom_call.1} parent=1 // pred_check
      %p59 = pneg %p58
    $region27: #{tpu_custom_call.1} parent=1 // pred_check_branch
      %61 = sbr.rel (%p59) target = $region29
    $region28: #{tpu_custom_call.1} parent=1 // pred_region
      %62 = vst [vmem:[#allocation2] sm:$0xff] 0.0
    $region29: #{tpu_custom_call.1} parent=1 // pred_fallthru
      _
    %v63 = vld [vmem:[#allocation3] sm:$0xff]
    %v64 = vld [vmem:[#allocation3 + $0x8] sm:$0xff]
    %v65 = vld [vmem:[#allocation6] sm:$0xff]
    %v66 = vld [vmem:[#allocation6 + $0x8] sm:$0xff]
    %v67 = vmax.f32 %v63, 0.0
    %v68 = vmax.f32 %v64, 0.0
    %v69 = vmul.f32 %v63, %v65
    %v70 = vmul.f32 %v64, %v66
    %v71 = vsub.f32 %v67, %v69
    %v72 = vsub.f32 %v68, %v70
    %v73 = vand.u32 2147483647, %v63
    %v74 = vand.u32 2147483647, %v64
    %v75 = vsub.f32 0.0, %v73
    %v76 = vsub.f32 0.0, %v74
    %v77 = vmul.f32 %v75, 1.442695
    %v78 = vpow.pop %v77
    %v79 = vmul.f32 %v76, 1.442695
    %v80 = vpow.pop %v79
    %v81 = vadd.f32 %v78, 1.0
    %v82 = vlog2.pop %v81
    %v83 = vmul.f32 %v82, 0.6931472
    %v84 = vmul.f32 -0.5, %v78
    %v85 = vadd.f32 %v84, 1.0
    %v86 = vmul.f32 %v85, %v78
    %v87 = vand.u32 2147483647, %v78
    %vm88 = vcmp.lt.f32.partialorder %v87, 0.0004427343
    %v89 = vsel %vm88, %v86, %v83
    %v90 = vadd.f32 %v80, 1.0
    %v91 = vlog2.pop %v90
    %v92 = vmul.f32 %v91, 0.6931472
    %v93 = vmul.f32 -0.5, %v80
    %v94 = vadd.f32 %v93, 1.0
    %v95 = vmul.f32 %v94, %v80
    %v96 = vand.u32 2147483647, %v80
    %vm97 = vcmp.lt.f32.partialorder %v96, 0.0004427343
    %v98 = vsel %vm97, %v95, %v92
    %v99 = vadd.f32 %v71, %v89
    %v100 = vadd.f32 %v72, %v98
    %v101 = vld [vmem:[#allocation2] sm:$0xff]
    %v102 = vadd.f32 %v99, %v100
    %v103 = vadd.f32 %v101, %v102
    %104 = vst [vmem:[#allocation2] sm:$0xff] %v103
    // Predicated region
    $region30: #{tpu_custom_call.1} parent=1 // pred_check
      %p105 = pneg %p58
    $region31: #{tpu_custom_call.1} parent=1 // pred_check_branch
      %107 = sbr.rel (%p105) target = $region33
    $region32: #{tpu_custom_call.1} parent=1 // pred_region
      %v108 = vld [vmem:[#allocation2] sm:$0xff]
      %109 = vadd.xlane.f32.xlu0 %v108
      %v110 = vpop.xlane.xlu0 %109
      %v111 = vrot.slane %v110, 4
      %v112 = vadd.f32 %v110, %v111
      %v113 = vrot.slane %v112, 2
      %v114 = vadd.f32 %v112, %v113
      %v115 = vrot.slane %v114, 1
      %v116 = vadd.f32 %v114, %v115
      %s117 = vtos %v116
      %s118 = smul.f32 %s117, 0.00048828125
      %v119 = vld [vmem:[%s2] sm:$0x1]
      %v120 = vld [vmem:[%s3] sm:$0x1]
      %v121 = vadd.f32 %v120, 1.0
      %v122 = vmul.f32 %v119, %v119
      %v123 = vsub.f32 %v121, %v122
      %v124 = vmul.f32 %v120, 1.442695
      %v125 = vpow.pop %v124
      %v126 = vsub.f32 %v123, %v125
      %vm127 = vcmask 1040384
      %v128 = vsel %vm127, %v126, 0.0
      %129 = vadd.xlane.f32.xlu0 %v128
      %v130 = vpop.xlane.xlu0 %129
      %v131 = vrot.slane %v130, 4
      %v132 = vadd.f32 %v130, %v131
      %v133 = vrot.slane %v132, 2
      %v134 = vadd.f32 %v132, %v133
      %v135 = vrot.slane %v134, 1
      %v136 = vadd.f32 %v134, %v135
      %s137 = vtos %v136
      %s138 = smul.f32 %s137, -0.5
      %s139 = sadd.f32 %s118, %s138
      %v140 = vlaneseq
      %v141 = vshrl.u32 %v140, 7
      %v142 = vlaneseq
      %v143 = vand.u32 %v142, 127
      %vm144 = vcmp.eq.s32.totalorder %v141, 0
      %vm145 = vcmp.eq.s32.totalorder %v143, 0
      %vm146 = vmand %vm144, %vm145
      %v147 = vstv %s139
      %v148 = vsel %vm146, %v147, 0.0
      %149 = vst [vmem:[#allocation8] sm:$0xff] %v148
    $region33: #{tpu_custom_call.1} parent=1 // pred_fallthru
      _
    // Predicated region
    $region34: #{tpu_custom_call.1} parent=1 // pred_check
      _
    $region35: #{tpu_custom_call.1} parent=1 // pred_check_branch
      %151 = sbr.rel (0) target = $region37
    $region36: #{tpu_custom_call.1} parent=1 // pred_region
      %s153 = ssub.s32 128, 128
      %154 = vsyncadd [#allocation5], %s153
      %s156 = sshll.u32 [#allocation8], 4
      %s157 = int_to_ptr.vmem [resolvable:$true] %s156
      %159 = dma.vmem_to_hbm [thread:$0]  %s157, 128, %s4, [#allocation5]
    $region37: #{tpu_custom_call.1} parent=1 // pred_fallthru
      _
    // Predicated region
    $region38: #{tpu_custom_call.1} parent=1 // pred_check
      _
    $region39: #{tpu_custom_call.1} parent=1 // pred_check_branch
      %161 = sbr.rel (0) target = $region41
    $region40: #{tpu_custom_call.1} parent=1 // pred_region
      %162 = dma.done [#allocation5], 128
    $region41: #{tpu_custom_call.1} parent=1 // pred_fallthru
      _
    %163 = vsyncpa [#allocation4], 1
    %164 = vsyncpa [#allocation7], 1
    %165 = vsyncpa [#allocation5], 1

</llo_original>
